<compile_context>
chip_gen: v6e
topology: v6e:2x2x1
jax: 0.10.0
libtpu: 0.0.40
codegen_flags: <defaults>
</compile_context>

<pallas_src>
import jax
import jax.numpy as jnp
from jax.experimental import pallas as pl
from jax.experimental.pallas import tpu as pltpu

_LANE = 128   # lane width (last dim alignment)
_SUBLANE = 8  # sublane width (second-to-last dim alignment)


def _round_up(x: int, m: int) -> int:
    return (x + m - 1) // m * m


def _generator_kernel(x_ref, w1_ref, b1_ref, w2_ref, b2_ref, o_ref):
    """Fused MLP block: (x @ W1 + b1) -> LeakyReLU(0.01) -> (@ W2 + b2) -> sigmoid.

    Shapes (per grid step):
      x_ref:  (TB, Lp)  float32   zero-padded latent block (batch-tiled)
      w1_ref: (Lp, H)   bfloat16  zero-padded rows; resident across the grid
      b1_ref: (1,  H)   float32
      w2_ref: (H,  Op)  bfloat16  zero-padded cols; resident across the grid
      b2_ref: (1,  Op)  float32
      o_ref:  (TB, Op)  float32
    """
    # Layer 1: bf16 MXU matmul, f32 accumulation.
    x = x_ref[...].astype(jnp.bfloat16)
    h = jnp.dot(x, w1_ref[...], preferred_element_type=jnp.float32)
    h = h + b1_ref[...]                       # (TB, H) + (1, H) broadcast
    h = jnp.where(h > 0, h, 0.01 * h)         # LeakyReLU(0.01), f32 VPU math
    # Dropout(0.4) in eval mode == identity.

    # Layer 2: bf16 MXU matmul, f32 accumulation.
    y = jnp.dot(h.astype(jnp.bfloat16), w2_ref[...],
                preferred_element_type=jnp.float32)
    y = y + b2_ref[...]                       # (TB, Op) + (1, Op) broadcast
    y = jax.nn.sigmoid(y)                     # f32 EUP exp + divide
    # Dropout(0.4) in eval mode == identity.

    o_ref[...] = y.astype(o_ref.dtype)


def generator_forward(latent_vectors, params, image_dims=(28, 28), block_b=256):
    """Run the Generator forward pass with a single fused Pallas kernel.

    latent_vectors: (B, latent_dims) float32
    params: (w1, b1, w2, b2) float32, weights stored (in_features, out_features)
    returns: (B, 1, image_dims[0], image_dims[1]) float32
    """
    w1, b1, w2, b2 = params
    B, L = latent_vectors.shape
    H = w1.shape[1]
    O = w2.shape[1]
    assert w1.shape == (L, H)
    assert b1.shape == (1, H)
    assert w2.shape == (H, O)
    assert b2.shape == (1, O)
    assert H % _LANE == 0, "hidden_dims must be a multiple of 128 for this kernel"

    # Lane-align feature dims; sublane/tile-align the batch.
    Lp = _round_up(L, _LANE)                       # 100 -> 128
    Op = _round_up(O, _LANE)                       # 784 -> 896
    TB = min(block_b, _round_up(B, _SUBLANE))      # batch tile (>=8, <=block_b)
    Bp = _round_up(B, TB)

    # Zero-pad + cast. (In a production sampling loop, pad/cast the weights
    # once outside this function; it is a <0.5 MiB one-off here.)
    x_p = jnp.zeros((Bp, Lp), jnp.float32).at[:B, :L].set(latent_vectors)
    w1_p = jnp.zeros((Lp, H), jnp.bfloat16).at[:L, :].set(w1.astype(jnp.bfloat16))
    b1_p = b1.astype(jnp.float32)
    w2_p = jnp.zeros((H, Op), jnp.bfloat16).at[:, :O].set(w2.astype(jnp.bfloat16))
    b2_p = jnp.zeros((1, Op), jnp.float32).at[:, :O].set(b2)

    grid = (Bp // TB,)
    out_flat = pl.pallas_call(
        _generator_kernel,
        out_shape=jax.ShapeDtypeStruct((Bp, Op), jnp.float32),
        grid=grid,
        in_specs=[
            pl.BlockSpec((TB, Lp), lambda i: (i, 0)),   # batch-tiled latents
            pl.BlockSpec((Lp, H), lambda i: (0, 0)),    # resident weights
            pl.BlockSpec((1, H), lambda i: (0, 0)),
            pl.BlockSpec((H, Op), lambda i: (0, 0)),
            pl.BlockSpec((1, Op), lambda i: (0, 0)),
        ],
        out_specs=pl.BlockSpec((TB, Op), lambda i: (i, 0)),
        compiler_params=pltpu.CompilerParams(
            dimension_semantics=("parallel",)),
    )(x_p, w1_p, b1_p, w2_p, b2_p)

    return out_flat[:B, :O].reshape(B, 1, image_dims[0], image_dims[1])


def init_params(key, latent_dims=100, hidden_dims=128, image_dims=(28, 28)):
    """Deterministic init mimicking PyTorch Linear default (uniform +-1/sqrt(fan_in)).

    Weights are stored as (in_features, out_features), i.e. the transpose of
    torch.nn.Linear.weight, so the kernel can do x @ W directly.
    """
    out_dims = image_dims[0] * image_dims[1]
    k1, k2, k3, k4 = jax.random.split(key, 4)
    s1 = 1.0 / (latent_dims ** 0.5)
    s2 = 1.0 / (hidden_dims ** 0.5)
    w1 = jax.random.uniform(k1, (latent_dims, hidden_dims), jnp.float32, -s1, s1)
    b1 = jax.random.uniform(k2, (1, hidden_dims), jnp.float32, -s1, s1)
    w2 = jax.random.uniform(k3, (hidden_dims, out_dims), jnp.float32, -s2, s2)
    b2 = jax.random.uniform(k4, (1, out_dims), jnp.float32, -s2, s2)
    return w1, b1, w2, b2


if __name__ == "__main__":
    latent_dims = 100
    hidden_dims = 128
    image_dims = (28, 28)
    batch = 2

    key = jax.random.PRNGKey(0)
    k_params, k_z = jax.random.split(key)

    params = init_params(k_params, latent_dims, hidden_dims, image_dims)
    z = jax.random.normal(k_z, (batch, latent_dims), dtype=jnp.float32)

    imgs = generator_forward(z, params, image_dims)
    imgs = jax.block_until_ready(imgs)

    assert imgs.shape == (batch, 1, image_dims[0], image_dims[1])
    assert imgs.dtype == jnp.float32
    # Sigmoid output must be in (0, 1) for these small random logits.
    assert bool(jnp.all(imgs > 0.0)) and bool(jnp.all(imgs < 1.0))

    w1, b1, w2, b2 = params

    # Tight check against a reference using the same bf16-rounded operands.
    def bf(a):
        return a.astype(jnp.bfloat16).astype(jnp.float32)
    h_ref = bf(z) @ bf(w1) + b1
    h_ref = jnp.where(h_ref > 0, h_ref, 0.01 * h_ref)
    y_ref_bf16 = jax.nn.sigmoid(bf(h_ref) @ bf(w2) + b2).reshape(batch, 1, *image_dims)
    assert bool(jnp.allclose(imgs, y_ref_bf16, atol=2e-3, rtol=2e-3))

    # Loose sanity check against the pure-f32 reference (bf16 weight rounding).
    h_ref = z @ w1 + b1
    h_ref = jnp.where(h_ref > 0, h_ref, 0.01 * h_ref)
    y_ref_f32 = jax.nn.sigmoid(h_ref @ w2 + b2).reshape(batch, 1, *image_dims)
    assert bool(jnp.allclose(imgs, y_ref_f32, atol=3e-2, rtol=3e-2))

    print("KERNEL_OK")
</pallas_src>

<mosaic_0001>
module attributes {stable_mosaic.version = 11 : i64} {
  func.func @_generator_kernel(%arg0: i32, %arg1: memref<8x128xf32, #tpu.memory_space<vmem>>, %arg2: memref<128x128xbf16, #tpu.memory_space<vmem>>, %arg3: memref<1x128xf32, #tpu.memory_space<vmem>>, %arg4: memref<128x896xbf16, #tpu.memory_space<vmem>>, %arg5: memref<1x896xf32, #tpu.memory_space<vmem>>, %arg6: memref<8x896xf32, #tpu.memory_space<vmem>>) attributes {dimension_semantics = [#tpu.dimension_semantics<parallel>], iteration_bounds = array<i64: 1>, scalar_prefetch = 0 : i64, scratch_operands = 0 : i64, tpu.core_type = #tpu.core_type<tc>, window_params = [{transform_indices = @transform_0, window_bounds = array<i64: 8, 128>}, {pipeline_mode = #tpu.pipeline_mode<synchronous>, transform_indices = @transform_1, window_bounds = array<i64: 128, 128>}, {pipeline_mode = #tpu.pipeline_mode<synchronous>, transform_indices = @transform_2, window_bounds = array<i64: 1, 128>}, {pipeline_mode = #tpu.pipeline_mode<synchronous>, transform_indices = @transform_3, window_bounds = array<i64: 128, 896>}, {pipeline_mode = #tpu.pipeline_mode<synchronous>, transform_indices = @transform_4, window_bounds = array<i64: 1, 896>}, {transform_indices = @transform_5, window_bounds = array<i64: 8, 896>}]} {
    %c0 = arith.constant 0 : index
    %c0_0 = arith.constant 0 : index
    %0 = vector.load %arg1[%c0, %c0_0] : memref<8x128xf32, #tpu.memory_space<vmem>>, vector<8x128xf32>
    %1 = arith.truncf %0 : vector<8x128xf32> to vector<8x128xbf16>
    %c0_1 = arith.constant 0 : index
    %c0_2 = arith.constant 0 : index
    %2 = vector.load %arg2[%c0_1, %c0_2] : memref<128x128xbf16, #tpu.memory_space<vmem>>, vector<128x128xbf16>
    %cst = arith.constant dense<0.000000e+00> : vector<8x128xf32>
    %3 = tpu.matmul %1, %2, %cst {dimension_numbers = #tpu.dot_dimension_numbers<[1], [0], [0], [1], [0, 0, 1, 1], [], []>} : vector<8x128xbf16>, vector<128x128xbf16>, vector<8x128xf32> -> vector<8x128xf32>
    %c0_3 = arith.constant 0 : index
    %c0_4 = arith.constant 0 : index
    %4 = vector.load %arg3[%c0_3, %c0_4] : memref<1x128xf32, #tpu.memory_space<vmem>>, vector<1x128xf32>
    %5 = vector.broadcast %4 : vector<1x128xf32> to vector<8x128xf32>
    %6 = arith.addf %3, %5 : vector<8x128xf32>
    %cst_5 = arith.constant 0.000000e+00 : f32
    %7 = vector.broadcast %cst_5 : f32 to vector<8x128xf32>
    %8 = arith.cmpf ogt, %6, %7 : vector<8x128xf32>
    %cst_6 = arith.constant 0.00999999977 : f32
    %9 = vector.broadcast %cst_6 : f32 to vector<8x128xf32>
    %10 = arith.mulf %9, %6 : vector<8x128xf32>
    %11 = arith.select %8, %6, %10 : vector<8x128xi1>, vector<8x128xf32>
    %12 = arith.truncf %11 : vector<8x128xf32> to vector<8x128xbf16>
    %c0_7 = arith.constant 0 : index
    %c0_8 = arith.constant 0 : index
    %13 = vector.load %arg4[%c0_7, %c0_8] : memref<128x896xbf16, #tpu.memory_space<vmem>>, vector<128x896xbf16>
    %cst_9 = arith.constant dense<0.000000e+00> : vector<8x896xf32>
    %14 = tpu.matmul %12, %13, %cst_9 {dimension_numbers = #tpu.dot_dimension_numbers<[1], [0], [0], [1], [0, 0, 1, 1], [], []>} : vector<8x128xbf16>, vector<128x896xbf16>, vector<8x896xf32> -> vector<8x896xf32>
    %c0_10 = arith.constant 0 : index
    %c0_11 = arith.constant 0 : index
    %15 = vector.load %arg5[%c0_10, %c0_11] : memref<1x896xf32, #tpu.memory_space<vmem>>, vector<1x896xf32>
    %16 = vector.broadcast %15 : vector<1x896xf32> to vector<8x896xf32>
    %17 = arith.addf %14, %16 : vector<8x896xf32>
    %18 = arith.negf %17 : vector<8x896xf32>
    %19 = math.exp %18 : vector<8x896xf32>
    %cst_12 = arith.constant 1.000000e+00 : f32
    %20 = vector.broadcast %cst_12 : f32 to vector<8x896xf32>
    %21 = arith.addf %20, %19 : vector<8x896xf32>
    %22 = arith.divf %20, %21 : vector<8x896xf32>
    %c0_13 = arith.constant 0 : index
    %c0_14 = arith.constant 0 : index
    %23 = vector.load %arg6[%c0_13, %c0_14] : memref<8x896xf32, #tpu.memory_space<vmem>>, vector<8x896xf32>
    tpu.vector_store %arg6[%c0_13, %c0_14], %22 {strides = array<i32>} : memref<8x896xf32, #tpu.memory_space<vmem>>, vector<8x896xf32>,
    return
  }
  func.func @transform_0(%arg0: i32) -> (i32, i32) {
    %c0_i32 = arith.constant 0 : i32
    %c0_i32_0 = arith.constant 0 : i32
    return %arg0, %c0_i32 : i32, i32
  }
  func.func @transform_1(%arg0: i32) -> (i32, i32) {
    %c0_i32 = arith.constant 0 : i32
    %c0_i32_0 = arith.constant 0 : i32
    %c0_i32_1 = arith.constant 0 : i32
    return %c0_i32, %c0_i32_0 : i32, i32
  }
  func.func @transform_2(%arg0: i32) -> (i32, i32) {
    %c0_i32 = arith.constant 0 : i32
    %c0_i32_0 = arith.constant 0 : i32
    %c0_i32_1 = arith.constant 0 : i32
    return %c0_i32, %c0_i32_0 : i32, i32
  }
  func.func @transform_3(%arg0: i32) -> (i32, i32) {
    %c0_i32 = arith.constant 0 : i32
    %c0_i32_0 = arith.constant 0 : i32
    %c0_i32_1 = arith.constant 0 : i32
    return %c0_i32, %c0_i32_0 : i32, i32
  }
  func.func @transform_4(%arg0: i32) -> (i32, i32) {
    %c0_i32 = arith.constant 0 : i32
    %c0_i32_0 = arith.constant 0 : i32
    %c0_i32_1 = arith.constant 0 : i32
    return %c0_i32, %c0_i32_0 : i32, i32
  }
  func.func @transform_5(%arg0: i32) -> (i32, i32) {
    %c0_i32 = arith.constant 0 : i32
    %c0_i32_0 = arith.constant 0 : i32
    return %arg0, %c0_i32 : i32, i32
  }
}

</mosaic_0001>

<llo_original>
// kernel: tpu_custom_call.1
$region0: #{tpu_custom_call.1}
  #allocation0 [shape = 'u32[]', space=smem, size = 0x4, offset = 0x4, fixed_abs, tag = 'smem constant byte address 0x4 - core index']
  #allocation1 [shape = 'u32[144,128]{1,0:T(1,128)}', space=vmem, size = 0x12000, scoped, tag = 'internal scratch']
  %s0 = inlined_call_operand.hbm [shape: f32[8,128], index: 0, kind: input, shape index: {}]
  %s1 = inlined_call_operand.hbm [shape: bf16[128,128], index: 1, kind: input, shape index: {}]
  %s2 = inlined_call_operand.hbm [shape: f32[1,128], index: 2, kind: input, shape index: {}]
  %s3 = inlined_call_operand.hbm [shape: bf16[128,896], index: 3, kind: input, shape index: {}]
  %s4 = inlined_call_operand.vmem [shape: f32[1,896], index: 4, kind: input, shape index: {}]
  %s5 = inlined_call_operand.hbm [shape: f32[8,896], index: 5, kind: output, shape index: {}]
  %s6 = sld [smem:[#allocation0]]
  $region46: #{tpu_custom_call.1} parent=0
    _
  %s8 = ssub.s32 1, %s6
  %s9 = scalar_select 0, %s8, %s6
  $region1: #{tpu_custom_call.1} parent=0
    #allocation2 [shape = 'u8[4096]{0}', space=vmem, size = 0x1000, scoped, tag = 'input window, operand 0, single buffered']
    #allocation3 [shape = 's32[1]{0}', space=sflag, size = 0x4, scoped, tag = 'scoped memory for tpu_custom_call.1']
    #allocation4 [shape = 's32[1]{0}', space=sflag, size = 0x4, scoped, tag = 'scoped memory for tpu_custom_call.1']
    #allocation5 [shape = 'u8[32768]{0}', space=vmem, size = 0x8000, scoped, tag = 'input window, operand 1, single buffered']
    #allocation6 [shape = 's32[1]{0}', space=sflag, size = 0x4, scoped, tag = 'scoped memory for tpu_custom_call.1']
    #allocation7 [shape = 'u8[512]{0}', space=vmem, size = 0x400, scoped, tag = 'input window, operand 2, single buffered']
    #allocation8 [shape = 'u8[229376]{0}', space=vmem, size = 0x38000, scoped, tag = 'input window, operand 3, single buffered']
    #allocation9 [shape = 's32[1]{0}', space=sflag, size = 0x4, scoped, tag = 'scoped memory for tpu_custom_call.1']
    #allocation10 [shape = 'u8[28672]{0}', space=vmem, size = 0x7000, scoped, tag = 'output window, operand 0, single buffered']
    %10 = vsyncpa [#allocation3], 0
    %11 = vsyncpa [#allocation6], 0
    %12 = vsyncpa [#allocation9], 0
    %13 = vsyncpa [#allocation4], 0
    // Predicated region
    $region2: #{tpu_custom_call.1} parent=1 // pred_check
      _
    $region3: #{tpu_custom_call.1} parent=1 // pred_check_branch
      %15 = sbr.rel (0) target = $region5
    $region4: #{tpu_custom_call.1} parent=1 // pred_region
      %s17 = ssub.s32 128, 128
      %18 = vsyncadd [#allocation3], %s17
      %s20 = sshll.u32 [#allocation2], 4
      %s21 = int_to_ptr.vmem [resolvable:$true] %s20
      %23 = dma.hbm_to_vmem [thread:$0]  %s0, 128, %s21, [#allocation3]
    $region5: #{tpu_custom_call.1} parent=1 // pred_fallthru
      _
    // Predicated region
    $region6: #{tpu_custom_call.1} parent=1 // pred_check
      _
    $region7: #{tpu_custom_call.1} parent=1 // pred_check_branch
      %25 = sbr.rel (0) target = $region9
    $region8: #{tpu_custom_call.1} parent=1 // pred_region
      %s27 = ssub.s32 1024, 1024
      %28 = vsyncadd [#allocation6], %s27
      %s29 = sshll.u32 [#allocation5], 4
      %s30 = int_to_ptr.vmem [resolvable:$true] %s29
      %35 = dma.hbm_to_vmem [thread:$0]  %s1, 1024, %s30, [#allocation6], 64, 64, 4
    $region9: #{tpu_custom_call.1} parent=1 // pred_fallthru
      _
    // Predicated region
    $region10: #{tpu_custom_call.1} parent=1 // pred_check
      _
    $region11: #{tpu_custom_call.1} parent=1 // pred_check_branch
      %37 = sbr.rel (0) target = $region13
    $region12: #{tpu_custom_call.1} parent=1 // pred_region
      %s39 = ssub.s32 16, 16
      %40 = vsyncadd [#allocation6], %s39
      %s42 = sshll.u32 [#allocation7], 4
      %s43 = int_to_ptr.vmem [resolvable:$true] %s42
      %45 = dma.hbm_to_vmem [thread:$0]  %s2, 16, %s43, [#allocation6]
    $region13: #{tpu_custom_call.1} parent=1 // pred_fallthru
      _
    // Predicated region
    $region14: #{tpu_custom_call.1} parent=1 // pred_check
      _
    $region15: #{tpu_custom_call.1} parent=1 // pred_check_branch
      %47 = sbr.rel (0) target = $region17
    $region16: #{tpu_custom_call.1} parent=1 // pred_region
      %s49 = ssub.s32 7168, 7168
      %50 = vsyncadd [#allocation9], %s49
      %s51 = sshll.u32 [#allocation8], 4
      %s52 = int_to_ptr.vmem [resolvable:$true] %s51
      %57 = dma.hbm_to_vmem [thread:$0]  %s3, 7168, %s52, [#allocation9], 448, 448, 28
    $region17: #{tpu_custom_call.1} parent=1 // pred_fallthru
      _
    // Predicated region
    $region18: #{tpu_custom_call.1} parent=1 // pred_check
      _
    $region19: #{tpu_custom_call.1} parent=1 // pred_check_branch
      %59 = sbr.rel (0) target = $region21
    $region20: #{tpu_custom_call.1} parent=1 // pred_region
      _
    $region21: #{tpu_custom_call.1} parent=1 // pred_fallthru
      _
    // Predicated region
    $region22: #{tpu_custom_call.1} parent=1 // pred_check
      _
    $region23: #{tpu_custom_call.1} parent=1 // pred_check_branch
      %61 = sbr.rel (0) target = $region25
    $region24: #{tpu_custom_call.1} parent=1 // pred_region
      %62 = dma.done [#allocation3], 128
    $region25: #{tpu_custom_call.1} parent=1 // pred_fallthru
      _
    // Predicated region
    $region26: #{tpu_custom_call.1} parent=1 // pred_check
      _
    $region27: #{tpu_custom_call.1} parent=1 // pred_check_branch
      %64 = sbr.rel (0) target = $region29
    $region28: #{tpu_custom_call.1} parent=1 // pred_region
      %65 = dma.done [#allocation6], 1024
    $region29: #{tpu_custom_call.1} parent=1 // pred_fallthru
      _
    // Predicated region
    $region30: #{tpu_custom_call.1} parent=1 // pred_check
      _
    $region31: #{tpu_custom_call.1} parent=1 // pred_check_branch
      %67 = sbr.rel (0) target = $region33
    $region32: #{tpu_custom_call.1} parent=1 // pred_region
      %68 = dma.done [#allocation6], 16
    $region33: #{tpu_custom_call.1} parent=1 // pred_fallthru
      _
    // Predicated region
    $region34: #{tpu_custom_call.1} parent=1 // pred_check
      _
    $region35: #{tpu_custom_call.1} parent=1 // pred_check_branch
      %70 = sbr.rel (0) target = $region37
    $region36: #{tpu_custom_call.1} parent=1 // pred_region
      %71 = dma.done [#allocation9], 7168
    $region37: #{tpu_custom_call.1} parent=1 // pred_fallthru
      _
    %v73 = vld [vmem:[#allocation2] sm:$0xff]
    %v74 = vpack.c.bf16 %v73, %v73
    %v75 = vld [vmem:[#allocation5] sm:$0xf]
    %v76 = vld [vmem:[#allocation5 + $0x4] sm:$0xf]
    %v77 = vld [vmem:[#allocation5 + $0x8] sm:$0xf]
    %v78 = vld [vmem:[#allocation5 + $0xc] sm:$0xf]
    %v79 = vld [vmem:[#allocation5 + $0x10] sm:$0xf]
    %v80 = vld [vmem:[#allocation5 + $0x14] sm:$0xf]
    %v81 = vld [vmem:[#allocation5 + $0x18] sm:$0xf]
    %v82 = vld [vmem:[#allocation5 + $0x1c] sm:$0xf]
    %v83 = vld [vmem:[#allocation5 + $0x20] sm:$0xf]
    %v84 = vld [vmem:[#allocation5 + $0x24] sm:$0xf]
    %v85 = vld [vmem:[#allocation5 + $0x28] sm:$0xf]
    %v86 = vld [vmem:[#allocation5 + $0x2c] sm:$0xf]
    %v87 = vld [vmem:[#allocation5 + $0x30] sm:$0xf]
    %v88 = vld [vmem:[#allocation5 + $0x34] sm:$0xf]
    %v89 = vld [vmem:[#allocation5 + $0x38] sm:$0xf]
    %v90 = vld [vmem:[#allocation5 + $0x3c] sm:$0xf]
    %v91 = vld [vmem:[#allocation7] sm:$0x1]
    %v93 = vlaneseq
    %v94 = vshrl.u32 %v93, 7
    %v95 = vsub.s32 0, %v94
    %v96 = vrot.slane %v91, %v95
    %v114 = vunpack.c.l.b16 %v75
    %v115 = vunpack.c.l.b16 %v76
    %v116 = vunpack.c.l.b16 %v77
    %v117 = vunpack.c.l.b16 %v78
    %v118 = vunpack.c.l.b16 %v79
    %v119 = vunpack.c.l.b16 %v80
    %v120 = vunpack.c.l.b16 %v81
    %v121 = vunpack.c.l.b16 %v82
    %v122 = vunpack.c.l.b16 %v83
    %v123 = vunpack.c.l.b16 %v84
    %v124 = vunpack.c.l.b16 %v85
    %v125 = vunpack.c.l.b16 %v86
    %v126 = vunpack.c.l.b16 %v87
    %v127 = vunpack.c.l.b16 %v88
    %v128 = vunpack.c.l.b16 %v89
    %v129 = vunpack.c.l.b16 %v90
    %v130 = vpack.c.b16 %v115, %v114
    %v131 = vpack.c.b16 %v117, %v116
    %v132 = vpack.c.b16 %v119, %v118
    %v133 = vpack.c.b16 %v121, %v120
    %v134 = vpack.c.b16 %v123, %v122
    %v135 = vpack.c.b16 %v125, %v124
    %v136 = vpack.c.b16 %v127, %v126
    %v137 = vpack.c.b16 %v129, %v128
    %146 = vmatprep.subr.bf16.mxu0 0
    %147 = vmatpush1.bf16.msra.mxu0 %v137
    %148 = vmatprep.subr.bf16.mxu0 0
    %149 = vmatpush1.bf16.msra.mxu0 %v136
    %150 = vmatprep.subr.bf16.mxu0 0
    %151 = vmatpush1.bf16.msra.mxu0 %v135
    %152 = vmatprep.subr.bf16.mxu0 0
    %153 = vmatpush1.bf16.msra.mxu0 %v134
    %154 = vmatprep.subr.bf16.mxu0 0
    %155 = vmatpush1.bf16.msra.mxu0 %v133
    %156 = vmatprep.subr.bf16.mxu0 0
    %157 = vmatpush1.bf16.msra.mxu0 %v132
    %158 = vmatprep.subr.bf16.mxu0 0
    %159 = vmatpush1.bf16.msra.mxu0 %v131
    %160 = vmatprep.subr.bf16.mxu0 0
    %161 = vmatpush1.bf16.msra.mxu0 %v130
    %162 = vmatprep.subr.bf16.mxu0 0
    %163 = vmatpush2.bf16.msra.mxu0 0
    %164 = vmatprep.subr.bf16.mxu0 0
    %165 = vmatpush2.bf16.msra.mxu0 0
    %166 = vmatprep.subr.bf16.mxu0 0
    %167 = vmatpush2.bf16.msra.mxu0 0
    %168 = vmatprep.subr.bf16.mxu0 0
    %169 = vmatpush2.bf16.msra.mxu0 0
    %170 = vmatprep.subr.bf16.mxu0 0
    %171 = vmatpush2.bf16.msra.mxu0 0
    %172 = vmatprep.subr.bf16.mxu0 0
    %173 = vmatpush2.bf16.msra.mxu0 0
    %174 = vmatprep.subr.bf16.mxu0 0
    %175 = vmatpush2.bf16.msra.mxu0 0
    %176 = vmatprep.subr.bf16.mxu0 0
    %177 = vmatpush2.bf16.msra.mxu0 0
    %178 = vmatprep.mubr.bf16.mxu0 0
    %179 = vmatmul.mubr.bf16.gmra.mxu0 %v74
    %v180 = vpop.f32.mrf.mxu0
    %v181 = vadd.f32 %v96, %v180
    %v182 = vpop.f32.mrf.mxu0
    %v183 = vpop.f32.mrf.mxu0
    %v184 = vpop.f32.mrf.mxu0
    %185 = vdwg.mxu0
    %vm186 = vcmp.gt.f32.partialorder %v181, 0.0
    %v187 = vmul.f32 %v181, 0.01
    %v188 = vsel %vm186, %v181, %v187
    %v189 = vpack.c.bf16 %v188, %v188
    %v190 = vld [vmem:[#allocation8] sm:$0xff]
    %v191 = vld [vmem:[#allocation8 + $0x8] sm:$0xff]
    %v192 = vld [vmem:[#allocation8 + $0x10] sm:$0xff]
    %v193 = vld [vmem:[#allocation8 + $0x18] sm:$0xf]
    %v194 = vld [vmem:[#allocation8 + $0x1c] sm:$0xff]
    %v195 = vld [vmem:[#allocation8 + $0x24] sm:$0xff]
    %v196 = vld [vmem:[#allocation8 + $0x2c] sm:$0xff]
    %v197 = vld [vmem:[#allocation8 + $0x34] sm:$0xf]
    %v198 = vld [vmem:[#allocation8 + $0x38] sm:$0xff]
    %v199 = vld [vmem:[#allocation8 + $0x40] sm:$0xff]
    %v200 = vld [vmem:[#allocation8 + $0x48] sm:$0xff]
    %v201 = vld [vmem:[#allocation8 + $0x50] sm:$0xf]
    %v202 = vld [vmem:[#allocation8 + $0x54] sm:$0xff]
    %v203 = vld [vmem:[#allocation8 + $0x5c] sm:$0xff]
    %v204 = vld [vmem:[#allocation8 + $0x64] sm:$0xff]
    %v205 = vld [vmem:[#allocation8 + $0x6c] sm:$0xf]
    %v206 = vld [vmem:[#allocation8 + $0x70] sm:$0xff]
    %v207 = vld [vmem:[#allocation8 + $0x78] sm:$0xff]
    %v208 = vld [vmem:[#allocation8 + $0x80] sm:$0xff]
    %v209 = vld [vmem:[#allocation8 + $0x88] sm:$0xf]
    %v210 = vld [vmem:[#allocation8 + $0x8c] sm:$0xff]
    %v211 = vld [vmem:[#allocation8 + $0x94] sm:$0xff]
    %v212 = vld [vmem:[#allocation8 + $0x9c] sm:$0xff]
    %v213 = vld [vmem:[#allocation8 + $0xa4] sm:$0xf]
    %v214 = vld [vmem:[#allocation8 + $0xa8] sm:$0xff]
    %v215 = vld [vmem:[#allocation8 + $0xb0] sm:$0xff]
    %v216 = vld [vmem:[#allocation8 + $0xb8] sm:$0xff]
    %v217 = vld [vmem:[#allocation8 + $0xc0] sm:$0xf]
    %v218 = vld [vmem:[#allocation8 + $0xc4] sm:$0xff]
    %v219 = vld [vmem:[#allocation8 + $0xcc] sm:$0xff]
    %v220 = vld [vmem:[#allocation8 + $0xd4] sm:$0xff]
    %v221 = vld [vmem:[#allocation8 + $0xdc] sm:$0xf]
    %v222 = vld [vmem:[#allocation8 + $0xe0] sm:$0xff]
    %v223 = vld [vmem:[#allocation8 + $0xe8] sm:$0xff]
    %v224 = vld [vmem:[#allocation8 + $0xf0] sm:$0xff]
    %v225 = vld [vmem:[#allocation8 + $0xf8] sm:$0xf]
    %v226 = vld [vmem:[#allocation8 + $0xfc] sm:$0xff]
    %v227 = vld [vmem:[#allocation8 + $0x104] sm:$0xff]
    %v228 = vld [vmem:[#allocation8 + $0x10c] sm:$0xff]
    %v229 = vld [vmem:[#allocation8 + $0x114] sm:$0xf]
    %v230 = vld [vmem:[#allocation8 + $0x118] sm:$0xff]
    %v231 = vld [vmem:[#allocation8 + $0x120] sm:$0xff]
    %v232 = vld [vmem:[#allocation8 + $0x128] sm:$0xff]
    %v233 = vld [vmem:[#allocation8 + $0x130] sm:$0xf]
    %v234 = vld [vmem:[#allocation8 + $0x134] sm:$0xff]
    %v235 = vld [vmem:[#allocation8 + $0x13c] sm:$0xff]
    %v236 = vld [vmem:[#allocation8 + $0x144] sm:$0xff]
    %v237 = vld [vmem:[#allocation8 + $0x14c] sm:$0xf]
    %v238 = vld [vmem:[#allocation8 + $0x150] sm:$0xff]
    %v239 = vld [vmem:[#allocation8 + $0x158] sm:$0xff]
    %v240 = vld [vmem:[#allocation8 + $0x160] sm:$0xff]
    %v241 = vld [vmem:[#allocation8 + $0x168] sm:$0xf]
    %v242 = vld [vmem:[#allocation8 + $0x16c] sm:$0xff]
    %v243 = vld [vmem:[#allocation8 + $0x174] sm:$0xff]
    %v244 = vld [vmem:[#allocation8 + $0x17c] sm:$0xff]
    %v245 = vld [vmem:[#allocation8 + $0x184] sm:$0xf]
    %v246 = vld [vmem:[#allocation8 + $0x188] sm:$0xff]
    %v247 = vld [vmem:[#allocation8 + $0x190] sm:$0xff]
    %v248 = vld [vmem:[#allocation8 + $0x198] sm:$0xff]
    %v249 = vld [vmem:[#allocation8 + $0x1a0] sm:$0xf]
    %v250 = vld [vmem:[#allocation8 + $0x1a4] sm:$0xff]
    %v251 = vld [vmem:[#allocation8 + $0x1ac] sm:$0xff]
    %v252 = vld [vmem:[#allocation8 + $0x1b4] sm:$0xff]
    %v253 = vld [vmem:[#allocation8 + $0x1bc] sm:$0xf]
    %v254 = vld [vmem:[%s4] sm:$0xff]
    %v256 = vlaneseq
    %v257 = vshrl.u32 %v256, 7
    %v258 = vsub.s32 0, %v257
    %v259 = vrot.slane %v254, %v258
    %v260 = vlaneseq
    %v261 = vshrl.u32 %v260, 7
    %v262 = vsub.s32 1, %v261
    %v263 = vrot.slane %v254, %v262
    %v264 = vlaneseq
    %v265 = vshrl.u32 %v264, 7
    %v266 = vsub.s32 2, %v265
    %v267 = vrot.slane %v254, %v266
    %v268 = vlaneseq
    %v269 = vshrl.u32 %v268, 7
    %v270 = vsub.s32 3, %v269
    %v271 = vrot.slane %v254, %v270
    %v272 = vlaneseq
    %v273 = vshrl.u32 %v272, 7
    %v274 = vsub.s32 4, %v273
    %v275 = vrot.slane %v254, %v274
    %v276 = vlaneseq
    %v277 = vshrl.u32 %v276, 7
    %v278 = vsub.s32 5, %v277
    %v279 = vrot.slane %v254, %v278
    %v280 = vlaneseq
    %v281 = vshrl.u32 %v280, 7
    %v282 = vsub.s32 6, %v281
    %v283 = vrot.slane %v254, %v282
    %v355 = vunpack.c.l.b16 %v190
    %v356 = vunpack.c.h.b16 %v190
    %v357 = vunpack.c.l.b16 %v191
    %v358 = vunpack.c.h.b16 %v191
    %v359 = vunpack.c.l.b16 %v192
    %v360 = vunpack.c.h.b16 %v192
    %v361 = vunpack.c.l.b16 %v193
    %v362 = vunpack.c.l.b16 %v194
    %v363 = vunpack.c.h.b16 %v194
    %v364 = vunpack.c.l.b16 %v195
    %v365 = vunpack.c.h.b16 %v195
    %v366 = vunpack.c.l.b16 %v196
    %v367 = vunpack.c.h.b16 %v196
    %v368 = vunpack.c.l.b16 %v197
    %v369 = vunpack.c.l.b16 %v198
    %v370 = vunpack.c.h.b16 %v198
    %v371 = vunpack.c.l.b16 %v199
    %v372 = vunpack.c.h.b16 %v199
    %v373 = vunpack.c.l.b16 %v200
    %v374 = vunpack.c.h.b16 %v200
    %v375 = vunpack.c.l.b16 %v201
    %v376 = vunpack.c.l.b16 %v202
    %v377 = vunpack.c.h.b16 %v202
    %v378 = vunpack.c.l.b16 %v203
    %v379 = vunpack.c.h.b16 %v203
    %v380 = vunpack.c.l.b16 %v204
    %v381 = vunpack.c.h.b16 %v204
    %v382 = vunpack.c.l.b16 %v205
    %v383 = vunpack.c.l.b16 %v206
    %v384 = vunpack.c.h.b16 %v206
    %v385 = vunpack.c.l.b16 %v207
    %v386 = vunpack.c.h.b16 %v207
    %v387 = vunpack.c.l.b16 %v208
    %v388 = vunpack.c.h.b16 %v208
    %v389 = vunpack.c.l.b16 %v209
    %v390 = vunpack.c.l.b16 %v210
    %v391 = vunpack.c.h.b16 %v210
    %v392 = vunpack.c.l.b16 %v211
    %v393 = vunpack.c.h.b16 %v211
    %v394 = vunpack.c.l.b16 %v212
    %v395 = vunpack.c.h.b16 %v212
    %v396 = vunpack.c.l.b16 %v213
    %v397 = vunpack.c.l.b16 %v214
    %v398 = vunpack.c.h.b16 %v214
    %v399 = vunpack.c.l.b16 %v215
    %v400 = vunpack.c.h.b16 %v215
    %v401 = vunpack.c.l.b16 %v216
    %v402 = vunpack.c.h.b16 %v216
    %v403 = vunpack.c.l.b16 %v217
    %v404 = vunpack.c.l.b16 %v218
    %v405 = vunpack.c.h.b16 %v218
    %v406 = vunpack.c.l.b16 %v219
    %v407 = vunpack.c.h.b16 %v219
    %v408 = vunpack.c.l.b16 %v220
    %v409 = vunpack.c.h.b16 %v220
    %v410 = vunpack.c.l.b16 %v221
    %v411 = vunpack.c.l.b16 %v222
    %v412 = vunpack.c.h.b16 %v222
    %v413 = vunpack.c.l.b16 %v223
    %v414 = vunpack.c.h.b16 %v223
    %v415 = vunpack.c.l.b16 %v224
    %v416 = vunpack.c.h.b16 %v224
    %v417 = vunpack.c.l.b16 %v225
    %v418 = vunpack.c.l.b16 %v226
    %v419 = vunpack.c.h.b16 %v226
    %v420 = vunpack.c.l.b16 %v227
    %v421 = vunpack.c.h.b16 %v227
    %v422 = vunpack.c.l.b16 %v228
    %v423 = vunpack.c.h.b16 %v228
    %v424 = vunpack.c.l.b16 %v229
    %v425 = vunpack.c.l.b16 %v230
    %v426 = vunpack.c.h.b16 %v230
    %v427 = vunpack.c.l.b16 %v231
    %v428 = vunpack.c.h.b16 %v231
    %v429 = vunpack.c.l.b16 %v232
    %v430 = vunpack.c.h.b16 %v232
    %v431 = vunpack.c.l.b16 %v233
    %v432 = vunpack.c.l.b16 %v234
    %v433 = vunpack.c.h.b16 %v234
    %v434 = vunpack.c.l.b16 %v235
    %v435 = vunpack.c.h.b16 %v235
    %v436 = vunpack.c.l.b16 %v236
    %v437 = vunpack.c.h.b16 %v236
    %v438 = vunpack.c.l.b16 %v237
    %v439 = vunpack.c.l.b16 %v238
    %v440 = vunpack.c.h.b16 %v238
    %v441 = vunpack.c.l.b16 %v239
    %v442 = vunpack.c.h.b16 %v239
    %v443 = vunpack.c.l.b16 %v240
    %v444 = vunpack.c.h.b16 %v240
    %v445 = vunpack.c.l.b16 %v241
    %v446 = vunpack.c.l.b16 %v242
    %v447 = vunpack.c.h.b16 %v242
    %v448 = vunpack.c.l.b16 %v243
    %v449 = vunpack.c.h.b16 %v243
    %v450 = vunpack.c.l.b16 %v244
    %v451 = vunpack.c.h.b16 %v244
    %v452 = vunpack.c.l.b16 %v245
    %v453 = vunpack.c.l.b16 %v246
    %v454 = vunpack.c.h.b16 %v246
    %v455 = vunpack.c.l.b16 %v247
    %v456 = vunpack.c.h.b16 %v247
    %v457 = vunpack.c.l.b16 %v248
    %v458 = vunpack.c.h.b16 %v248
    %v459 = vunpack.c.l.b16 %v249
    %v460 = vunpack.c.l.b16 %v250
    %v461 = vunpack.c.h.b16 %v250
    %v462 = vunpack.c.l.b16 %v251
    %v463 = vunpack.c.h.b16 %v251
    %v464 = vunpack.c.l.b16 %v252
    %v465 = vunpack.c.h.b16 %v252
    %v466 = vunpack.c.l.b16 %v253
    %v467 = vpack.c.b16 %v362, %v355
    %v468 = vpack.c.b16 %v363, %v356
    %v469 = vpack.c.b16 %v364, %v357
    %v470 = vpack.c.b16 %v365, %v358
    %v471 = vpack.c.b16 %v366, %v359
    %v472 = vpack.c.b16 %v367, %v360
    %v473 = vpack.c.b16 %v368, %v361
    %v474 = vpack.c.b16 %v376, %v369
    %v475 = vpack.c.b16 %v377, %v370
    %v476 = vpack.c.b16 %v378, %v371
    %v477 = vpack.c.b16 %v379, %v372
    %v478 = vpack.c.b16 %v380, %v373
    %v479 = vpack.c.b16 %v381, %v374
    %v480 = vpack.c.b16 %v382, %v375
    %v481 = vpack.c.b16 %v390, %v383
    %v482 = vpack.c.b16 %v391, %v384
    %v483 = vpack.c.b16 %v392, %v385
    %v484 = vpack.c.b16 %v393, %v386
    %v485 = vpack.c.b16 %v394, %v387
    %v486 = vpack.c.b16 %v395, %v388
    %v487 = vpack.c.b16 %v396, %v389
    %v488 = vpack.c.b16 %v404, %v397
    %v489 = vpack.c.b16 %v405, %v398
    %v490 = vpack.c.b16 %v406, %v399
    %v491 = vpack.c.b16 %v407, %v400
    %v492 = vpack.c.b16 %v408, %v401
    %v493 = vpack.c.b16 %v409, %v402
    %v494 = vpack.c.b16 %v410, %v403
    %v495 = vpack.c.b16 %v418, %v411
    %v496 = vpack.c.b16 %v419, %v412
    %v497 = vpack.c.b16 %v420, %v413
    %v498 = vpack.c.b16 %v421, %v414
    %v499 = vpack.c.b16 %v422, %v415
    %v500 = vpack.c.b16 %v423, %v416
    %v501 = vpack.c.b16 %v424, %v417
    %v502 = vpack.c.b16 %v432, %v425
    %v503 = vpack.c.b16 %v433, %v426
    %v504 = vpack.c.b16 %v434, %v427
    %v505 = vpack.c.b16 %v435, %v428
    %v506 = vpack.c.b16 %v436, %v429
    %v507 = vpack.c.b16 %v437, %v430
    %v508 = vpack.c.b16 %v438, %v431
    %v509 = vpack.c.b16 %v446, %v439
    %v510 = vpack.c.b16 %v447, %v440
    %v511 = vpack.c.b16 %v448, %v441
    %v512 = vpack.c.b16 %v449, %v442
    %v513 = vpack.c.b16 %v450, %v443
    %v514 = vpack.c.b16 %v451, %v444
    %v515 = vpack.c.b16 %v452, %v445
    %v516 = vpack.c.b16 %v460, %v453
    %v517 = vpack.c.b16 %v461, %v454
    %v518 = vpack.c.b16 %v462, %v455
    %v519 = vpack.c.b16 %v463, %v456
    %v520 = vpack.c.b16 %v464, %v457
    %v521 = vpack.c.b16 %v465, %v458
    %v522 = vpack.c.b16 %v466, %v459
    %579 = vmatprep.subr.bf16.mxu0 %v517
    %580 = vmatpush1.bf16.msra.mxu0 %v516
    %581 = vmatprep.subr.bf16.mxu0 %v510
    %582 = vmatpush1.bf16.msra.mxu0 %v509
    %583 = vmatprep.subr.bf16.mxu0 %v503
    %584 = vmatpush1.bf16.msra.mxu0 %v502
    %585 = vmatprep.subr.bf16.mxu0 %v496
    %586 = vmatpush1.bf16.msra.mxu0 %v495
    %587 = vmatprep.subr.bf16.mxu0 %v489
    %588 = vmatpush1.bf16.msra.mxu0 %v488
    %589 = vmatprep.subr.bf16.mxu0 %v482
    %590 = vmatpush1.bf16.msra.mxu0 %v481
    %591 = vmatprep.subr.bf16.mxu0 %v475
    %592 = vmatpush1.bf16.msra.mxu0 %v474
    %593 = vmatprep.subr.bf16.mxu0 %v468
    %594 = vmatpush1.bf16.msra.mxu0 %v467
    %595 = vmatprep.subr.bf16.mxu0 0
    %596 = vmatpush2.bf16.msra.mxu0 0
    %597 = vmatprep.subr.bf16.mxu0 0
    %598 = vmatpush2.bf16.msra.mxu0 0
    %599 = vmatprep.subr.bf16.mxu0 0
    %600 = vmatpush2.bf16.msra.mxu0 0
    %601 = vmatprep.subr.bf16.mxu0 0
    %602 = vmatpush2.bf16.msra.mxu0 0
    %603 = vmatprep.subr.bf16.mxu0 0
    %604 = vmatpush2.bf16.msra.mxu0 0
    %605 = vmatprep.subr.bf16.mxu0 0
    %606 = vmatpush2.bf16.msra.mxu0 0
    %607 = vmatprep.subr.bf16.mxu0 0
    %608 = vmatpush2.bf16.msra.mxu0 0
    %609 = vmatprep.subr.bf16.mxu0 0
    %610 = vmatpush2.bf16.msra.mxu0 0
    %611 = vmatprep.mubr.bf16.mxu0 0
    %612 = vmatmul.mubr.bf16.gmra.mxu0 %v189
    %v613 = vpop.f32.mrf.mxu0
    %v614 = vadd.f32 %v259, %v613
    %v615 = vpop.f32.mrf.mxu0
    %v616 = vadd.f32 %v263, %v615
    %v617 = vpop.f32.mrf.mxu0
    %v618 = vpop.f32.mrf.mxu0
    %619 = vdwg.mxu0
    %620 = vmatprep.subr.bf16.mxu0 %v519
    %621 = vmatpush1.bf16.msra.mxu0 %v518
    %622 = vmatprep.subr.bf16.mxu0 %v512
    %623 = vmatpush1.bf16.msra.mxu0 %v511
    %624 = vmatprep.subr.bf16.mxu0 %v505
    %625 = vmatpush1.bf16.msra.mxu0 %v504
    %626 = vmatprep.subr.bf16.mxu0 %v498
    %627 = vmatpush1.bf16.msra.mxu0 %v497
    %628 = vmatprep.subr.bf16.mxu0 %v491
    %629 = vmatpush1.bf16.msra.mxu0 %v490
    %630 = vmatprep.subr.bf16.mxu0 %v484
    %631 = vmatpush1.bf16.msra.mxu0 %v483
    %632 = vmatprep.subr.bf16.mxu0 %v477
    %633 = vmatpush1.bf16.msra.mxu0 %v476
    %634 = vmatprep.subr.bf16.mxu0 %v470
    %635 = vmatpush1.bf16.msra.mxu0 %v469
    %636 = vmatprep.subr.bf16.mxu0 0
    %637 = vmatpush2.bf16.msra.mxu0 0
    %638 = vmatprep.subr.bf16.mxu0 0
    %639 = vmatpush2.bf16.msra.mxu0 0
    %640 = vmatprep.subr.bf16.mxu0 0
    %641 = vmatpush2.bf16.msra.mxu0 0
    %642 = vmatprep.subr.bf16.mxu0 0
    %643 = vmatpush2.bf16.msra.mxu0 0
    %644 = vmatprep.subr.bf16.mxu0 0
    %645 = vmatpush2.bf16.msra.mxu0 0
    %646 = vmatprep.subr.bf16.mxu0 0
    %647 = vmatpush2.bf16.msra.mxu0 0
    %648 = vmatprep.subr.bf16.mxu0 0
    %649 = vmatpush2.bf16.msra.mxu0 0
    %650 = vmatprep.subr.bf16.mxu0 0
    %651 = vmatpush2.bf16.msra.mxu0 0
    %652 = vmatprep.mubr.bf16.mxu0 0
    %653 = vmatmul.mubr.bf16.gmra.mxu0 %v189
    %v654 = vpop.f32.mrf.mxu0
    %v655 = vadd.f32 %v267, %v654
    %v656 = vpop.f32.mrf.mxu0
    %v657 = vadd.f32 %v271, %v656
    %v658 = vpop.f32.mrf.mxu0
    %v659 = vpop.f32.mrf.mxu0
    %660 = vdwg.mxu0
    %661 = vmatprep.subr.bf16.mxu0 %v521
    %662 = vmatpush1.bf16.msra.mxu0 %v520
    %663 = vmatprep.subr.bf16.mxu0 %v514
    %664 = vmatpush1.bf16.msra.mxu0 %v513
    %665 = vmatprep.subr.bf16.mxu0 %v507
    %666 = vmatpush1.bf16.msra.mxu0 %v506
    %667 = vmatprep.subr.bf16.mxu0 %v500
    %668 = vmatpush1.bf16.msra.mxu0 %v499
    %669 = vmatprep.subr.bf16.mxu0 %v493
    %670 = vmatpush1.bf16.msra.mxu0 %v492
    %671 = vmatprep.subr.bf16.mxu0 %v486
    %672 = vmatpush1.bf16.msra.mxu0 %v485
    %673 = vmatprep.subr.bf16.mxu0 %v479
    %674 = vmatpush1.bf16.msra.mxu0 %v478
    %675 = vmatprep.subr.bf16.mxu0 %v472
    %676 = vmatpush1.bf16.msra.mxu0 %v471
    %677 = vmatprep.subr.bf16.mxu0 0
    %678 = vmatpush2.bf16.msra.mxu0 0
    %679 = vmatprep.subr.bf16.mxu0 0
    %680 = vmatpush2.bf16.msra.mxu0 0
    %681 = vmatprep.subr.bf16.mxu0 0
    %682 = vmatpush2.bf16.msra.mxu0 0
    %683 = vmatprep.subr.bf16.mxu0 0
    %684 = vmatpush2.bf16.msra.mxu0 0
    %685 = vmatprep.subr.bf16.mxu0 0
    %686 = vmatpush2.bf16.msra.mxu0 0
    %687 = vmatprep.subr.bf16.mxu0 0
    %688 = vmatpush2.bf16.msra.mxu0 0
    %689 = vmatprep.subr.bf16.mxu0 0
    %690 = vmatpush2.bf16.msra.mxu0 0
    %691 = vmatprep.subr.bf16.mxu0 0
    %692 = vmatpush2.bf16.msra.mxu0 0
    %693 = vmatprep.mubr.bf16.mxu0 0
    %694 = vmatmul.mubr.bf16.gmra.mxu0 %v189
    %v695 = vpop.f32.mrf.mxu0
    %v696 = vadd.f32 %v275, %v695
    %v697 = vpop.f32.mrf.mxu0
    %v698 = vadd.f32 %v279, %v697
    %v699 = vpop.f32.mrf.mxu0
    %v700 = vpop.f32.mrf.mxu0
    %701 = vdwg.mxu0
    %702 = vmatprep.subr.bf16.mxu0 0
    %703 = vmatpush1.bf16.msra.mxu0 %v522
    %704 = vmatprep.subr.bf16.mxu0 0
    %705 = vmatpush1.bf16.msra.mxu0 %v515
    %706 = vmatprep.subr.bf16.mxu0 0
    %707 = vmatpush1.bf16.msra.mxu0 %v508
    %708 = vmatprep.subr.bf16.mxu0 0
    %709 = vmatpush1.bf16.msra.mxu0 %v501
    %710 = vmatprep.subr.bf16.mxu0 0
    %711 = vmatpush1.bf16.msra.mxu0 %v494
    %712 = vmatprep.subr.bf16.mxu0 0
    %713 = vmatpush1.bf16.msra.mxu0 %v487
    %714 = vmatprep.subr.bf16.mxu0 0
    %715 = vmatpush1.bf16.msra.mxu0 %v480
    %716 = vmatprep.subr.bf16.mxu0 0
    %717 = vmatpush1.bf16.msra.mxu0 %v473
    %718 = vmatprep.subr.bf16.mxu0 0
    %719 = vmatpush2.bf16.msra.mxu0 0
    %720 = vmatprep.subr.bf16.mxu0 0
    %721 = vmatpush2.bf16.msra.mxu0 0
    %722 = vmatprep.subr.bf16.mxu0 0
    %723 = vmatpush2.bf16.msra.mxu0 0
    %724 = vmatprep.subr.bf16.mxu0 0
    %725 = vmatpush2.bf16.msra.mxu0 0
    %726 = vmatprep.subr.bf16.mxu0 0
    %727 = vmatpush2.bf16.msra.mxu0 0
    %728 = vmatprep.subr.bf16.mxu0 0
    %729 = vmatpush2.bf16.msra.mxu0 0
    %730 = vmatprep.subr.bf16.mxu0 0
    %731 = vmatpush2.bf16.msra.mxu0 0
    %732 = vmatprep.subr.bf16.mxu0 0
    %733 = vmatpush2.bf16.msra.mxu0 0
    %734 = vmatprep.mubr.bf16.mxu0 0
    %735 = vmatmul.mubr.bf16.gmra.mxu0 %v189
    %v736 = vpop.f32.mrf.mxu0
    %v737 = vadd.f32 %v283, %v736
    %v738 = vpop.f32.mrf.mxu0
    %v739 = vpop.f32.mrf.mxu0
    %v740 = vpop.f32.mrf.mxu0
    %741 = vdwg.mxu0
    %v742 = vxor.u32 %v614, 2147483648
    %v743 = vxor.u32 %v616, 2147483648
    %v744 = vxor.u32 %v655, 2147483648
    %v745 = vxor.u32 %v657, 2147483648
    %v746 = vxor.u32 %v696, 2147483648
    %v747 = vxor.u32 %v698, 2147483648
    %v748 = vxor.u32 %v737, 2147483648
    %v749 = vmul.f32 %v742, 1.442695
    %v750 = vpow.pop %v749
    %v751 = vmul.f32 %v743, 1.442695
    %v752 = vpow.pop %v751
    %v753 = vmul.f32 %v744, 1.442695
    %v754 = vpow.pop %v753
    %v755 = vmul.f32 %v745, 1.442695
    %v756 = vpow.pop %v755
    %v757 = vmul.f32 %v746, 1.442695
    %v758 = vpow.pop %v757
    %v759 = vmul.f32 %v747, 1.442695
    %v760 = vpow.pop %v759
    %v761 = vmul.f32 %v748, 1.442695
    %v762 = vpow.pop %v761
    %v763 = vadd.f32 %v750, 1.0
    %v764 = vadd.f32 %v752, 1.0
    %v765 = vadd.f32 %v754, 1.0
    %v766 = vadd.f32 %v756, 1.0
    %v767 = vadd.f32 %v758, 1.0
    %v768 = vadd.f32 %v760, 1.0
    %v769 = vadd.f32 %v762, 1.0
    %v770 = vrcp.pop %v763
    %v771 = vmul.f32 1.0, %v770
    %v772 = vrcp.pop %v764
    %v773 = vmul.f32 1.0, %v772
    %v774 = vrcp.pop %v765
    %v775 = vmul.f32 1.0, %v774
    %v776 = vrcp.pop %v766
    %v777 = vmul.f32 1.0, %v776
    %v778 = vrcp.pop %v767
    %v779 = vmul.f32 1.0, %v778
    %v780 = vrcp.pop %v768
    %v781 = vmul.f32 1.0, %v780
    %v782 = vrcp.pop %v769
    %v783 = vmul.f32 1.0, %v782
    %784 = vst [vmem:[#allocation10] sm:$0xff] %v771
    %785 = vst [vmem:[#allocation10 + $0x8] sm:$0xff] %v773
    %786 = vst [vmem:[#allocation10 + $0x10] sm:$0xff] %v775
    %787 = vst [vmem:[#allocation10 + $0x18] sm:$0xff] %v777
    %788 = vst [vmem:[#allocation10 + $0x20] sm:$0xff] %v779
    %789 = vst [vmem:[#allocation10 + $0x28] sm:$0xff] %v781
    %790 = vst [vmem:[#allocation10 + $0x30] sm:$0xff] %v783
    // Predicated region
    $region38: #{tpu_custom_call.1} parent=1 // pred_check
      _
    $region39: #{tpu_custom_call.1} parent=1 // pred_check_branch
      %792 = sbr.rel (0) target = $region41
    $region40: #{tpu_custom_call.1} parent=1 // pred_region
      %s794 = ssub.s32 896, 896
      %795 = vsyncadd [#allocation4], %s794
      %s797 = sshll.u32 [#allocation10], 4
      %s798 = int_to_ptr.vmem [resolvable:$true] %s797
      %800 = dma.vmem_to_hbm [thread:$0]  %s798, 896, %s5, [#allocation4]
    $region41: #{tpu_custom_call.1} parent=1 // pred_fallthru
      _
    // Predicated region
    $region42: #{tpu_custom_call.1} parent=1 // pred_check
      _
    $region43: #{tpu_custom_call.1} parent=1 // pred_check_branch
      %802 = sbr.rel (0) target = $region45
    $region44: #{tpu_custom_call.1} parent=1 // pred_region
      %803 = dma.done [#allocation4], 896
    $region45: #{tpu_custom_call.1} parent=1 // pred_fallthru
      _
    %804 = vsyncpa [#allocation3], 1
    %805 = vsyncpa [#allocation6], 1
    %806 = vsyncpa [#allocation9], 1
    %807 = vsyncpa [#allocation4], 1

</llo_original>
